<compile_context>
chip_gen: v6e
topology: v6e:2x2x1
jax: 0.10.0
libtpu: 0.0.40
codegen_flags: <defaults>
</compile_context>

<pallas_src>
import functools

import jax
import jax.numpy as jnp
from jax.experimental import pallas as pl
from jax.experimental.pallas import tpu as pltpu


_N_LANES = 128    # class dim padded to one full lane width (lane-dense output)
_TK_MAX = 2048    # Din reduction tile cap: W tile = TK*D*2B (~512 KiB at D=128),
                  # ~1 MiB double-buffered -> ~85% HBM roofline, safe v5e..v7x.


def _round_up(x, m):
    return (x + m - 1) // m * m


def _pick_tk(din):
    """Din reduction tile: the whole (128-aligned) Din if it fits, else _TK_MAX."""
    return min(_round_up(din, 128), _TK_MAX)


def _vmem_limit_bytes(bsz, nk, tk, d):
    """Scoped-VMEM request from the actual working set; v7x only has 64 MiB
    physical (32 MiB default scoped), so cap at 48 MiB with headroom."""
    streamed = 2 * ((bsz + nk) * tk * 2 + tk * d * 2)        # double-buffered bf16 X/W tiles
    resident = nk * 2 * _N_LANES * 2 + d * 4 + 2 * bsz * _N_LANES * 4   # wpn + bias + out
    acc = (bsz + nk) * d * 4                                 # f32 embeddings / accumulators
    need = streamed + resident + acc
    return int(min(max(2 * need, 16 << 20), 48 << 20))


# ----------------------------------------------------------------------------
# Shared prototypical-scoring epilogue (runs once, on the last grid step).
#   q:     [B,  D]        f32   query embeddings
#   s:     [NK, D]        f32   support embeddings
#   wpn:   [NK, 2*NL]     bf16  prototype mixing weights (pos cols, then neg)
#   o_ref: [B,  NL]       f32   lane-dense per-class probabilities
# ----------------------------------------------------------------------------
def _prototypical_epilogue(q, s, wpn, o_ref, *, n_lanes):
    # prototypes in transposed (lane = class) layout: protos_t[:, c] is the
    # pos prototype of class c, protos_t[:, n_lanes + c] the neg prototype.
    protos_t = jax.lax.dot_general(
        s.astype(jnp.bfloat16), wpn,
        dimension_numbers=(((0,), (0,)), ((), ())),
        preferred_element_type=jnp.float32)                  # [D, 2*NL]
    pos_t = protos_t[:, :n_lanes]                            # [D, NL]
    neg_t = protos_t[:, n_lanes:]                            # [D, NL]
    diff_t = pos_t - neg_t                                    # [D, NL]

    # ||neg||^2 - ||pos||^2, kept 2-D and lane-aligned: [1, NL]
    sq_bias = jnp.sum((neg_t - pos_t) * (neg_t + pos_t), axis=0, keepdims=True)

    # d_neg - d_pos = (||neg||^2 - ||pos||^2) + 2 * q @ (pos - neg)   (||q||^2 cancels)
    qd = jnp.dot(q, diff_t, preferred_element_type=jnp.float32)       # [B, NL]
    logits = sq_bias + 2.0 * qd
    # 2-way softmax over {pos, neg} prototypes == sigmoid(d_neg - d_pos)
    o_ref[...] = jax.nn.sigmoid(logits).astype(o_ref.dtype)


# ----------------------------------------------------------------------------
# Single-step fused kernel (Din fits one tile): no scratch, no pl.when.
# ----------------------------------------------------------------------------
def _fsl_fused_kernel(xq_ref, xs_ref, w_ref, b_ref, wpn_ref, o_ref, *, n_lanes):
    w = w_ref[...]
    b = b_ref[...]
    q = jnp.dot(xq_ref[...], w, preferred_element_type=jnp.float32) + b
    s = jnp.dot(xs_ref[...], w, preferred_element_type=jnp.float32) + b
    _prototypical_epilogue(q, s, wpn_ref[...], o_ref, n_lanes=n_lanes)


# ----------------------------------------------------------------------------
# Multi-step kernel (large Din): grid over the Din reduction axis with
# f32 VMEM accumulators and pl.when init / finalize.
# ----------------------------------------------------------------------------
def _fsl_multistep_kernel(xq_ref, xs_ref, w_ref, b_ref, wpn_ref, o_ref,
                          accq_ref, accs_ref, *, n_lanes):
    k = pl.program_id(0)

    @pl.when(k == 0)
    def _init():
        accq_ref[...] = jnp.zeros_like(accq_ref)
        accs_ref[...] = jnp.zeros_like(accs_ref)

    w = w_ref[...]
    accq_ref[...] += jnp.dot(xq_ref[...], w, preferred_element_type=jnp.float32)
    accs_ref[...] += jnp.dot(xs_ref[...], w, preferred_element_type=jnp.float32)

    @pl.when(k == pl.num_programs(0) - 1)
    def _finalize():
        b = b_ref[...]
        _prototypical_epilogue(accq_ref[...] + b, accs_ref[...] + b,
                               wpn_ref[...], o_ref, n_lanes=n_lanes)


# ----------------------------------------------------------------------------
# One-time parameter prep (outside the per-call jit): cast W to the bf16 MXU
# dtype and zero-pad Din to a multiple of the reduction tile, so the per-call
# forward never rewrites W in HBM.
# ----------------------------------------------------------------------------
def prepare_backbone_params(w_emb, b_emb):
    din, d = w_emb.shape
    tk = _pick_tk(din)
    din_pad = _round_up(din, tk)
    w_pad = jnp.zeros((din_pad, d), jnp.bfloat16).at[:din, :].set(
        w_emb.astype(jnp.bfloat16))
    b_vec = b_emb.reshape(1, d).astype(jnp.float32)
    return w_pad, b_vec


# ----------------------------------------------------------------------------
# Full forward (glue in plain JAX, hot path in the single fused Pallas kernel)
# ----------------------------------------------------------------------------
@jax.jit
def semantic_attribute_fsl_forward(x, support_imgs, support_lbls, w_pad, b_vec):
    """
    x:            [B, C, H, W]      query images
    support_imgs: [N, K, C, H, W]   N classes, K shots each
    support_lbls: [N, K]            1.0 = positive shot, 0.0 = negative shot
    w_pad:        [Din_pad, D]      pre-padded bf16 backbone weights (prepare_backbone_params)
    b_vec:        [1, D]            f32 backbone bias
    returns:      [B, N]            per-class probabilities
    """
    bsz = x.shape[0]
    n_cls, k_shot = support_imgs.shape[:2]
    din = x.shape[1] * x.shape[2] * x.shape[3]
    din_pad, d = w_pad.shape
    nk = n_cls * k_shot

    tk = _pick_tk(din)
    assert din_pad % tk == 0, (din_pad, tk)
    n_grid = din_pad // tk

    # ---- query / support rows stay separate: no stacked HBM copy ----
    xq = x.reshape(bsz, din).astype(jnp.bfloat16)
    xs = support_imgs.reshape(nk, din).astype(jnp.bfloat16)
    if din_pad != din:
        # only the (small) activations are padded per call; W is pre-padded once
        xq = jnp.pad(xq, ((0, 0), (0, din_pad - din)))
        xs = jnp.pad(xs, ((0, 0), (0, din_pad - din)))

    # ---- prototype mixing weights, transposed so the kernel's protos matmul
    #      needs no s^T: column c mixes support rows into the class-c positive
    #      prototype, column 128+c into the negative one (lane-dense, bf16) ----
    # TODO(synk): classes whose shots are all-positive (or all-negative) fall
    # back to an all-zero prototype via max(sum, 1); the PyTorch reference's
    # behavior for that case is unspecified in the provided module.
    lbl = support_lbls.astype(jnp.float32)                    # [N, K]
    pos_w = lbl / jnp.maximum(jnp.sum(lbl, axis=1, keepdims=True), 1.0)
    neg_l = 1.0 - lbl
    neg_w = neg_l / jnp.maximum(jnp.sum(neg_l, axis=1, keepdims=True), 1.0)
    eye = jnp.eye(n_cls, dtype=jnp.float32)
    w_pos = (eye[:, :, None] * pos_w[None, :, :]).reshape(n_cls, nk)
    w_neg = (eye[:, :, None] * neg_w[None, :, :]).reshape(n_cls, nk)
    wpn_t = jnp.zeros((nk, 2 * _N_LANES), jnp.float32)
    wpn_t = wpn_t.at[:, :n_cls].set(w_pos.T)
    wpn_t = wpn_t.at[:, _N_LANES:_N_LANES + n_cls].set(w_neg.T)
    wpn_t = wpn_t.astype(jnp.bfloat16)

    vmem_limit = _vmem_limit_bytes(bsz, nk, tk, d)
    cost = pl.CostEstimate(
        flops=(2 * (bsz + nk) * din_pad * d
               + 2 * nk * d * 2 * _N_LANES
               + 2 * bsz * d * _N_LANES),
        transcendentals=bsz * _N_LANES,
        bytes_accessed=((xq.size + xs.size + w_pad.size + wpn_t.size) * 2
                        + b_vec.size * 4 + bsz * _N_LANES * 4),
    )

    if n_grid == 1:
        # Small-Din fast path: one step, no accumulator scratch, no pl.when;
        # W is streamed from HBM exactly once and everything stays in VMEM.
        out_pad = pl.pallas_call(
            functools.partial(_fsl_fused_kernel, n_lanes=_N_LANES),
            out_shape=jax.ShapeDtypeStruct((bsz, _N_LANES), jnp.float32),
            compiler_params=pltpu.CompilerParams(vmem_limit_bytes=vmem_limit),
            cost_estimate=cost,
        )(xq, xs, w_pad, b_vec, wpn_t)
    else:
        # Large-Din path: pipeline over Din tiles (pure reduction axis).
        out_pad = pl.pallas_call(
            functools.partial(_fsl_multistep_kernel, n_lanes=_N_LANES),
            out_shape=jax.ShapeDtypeStruct((bsz, _N_LANES), jnp.float32),
            grid_spec=pltpu.PrefetchScalarGridSpec(
                num_scalar_prefetch=0,
                grid=(n_grid,),
                in_specs=[
                    pl.BlockSpec((bsz, tk), lambda k: (0, k)),   # query tile
                    pl.BlockSpec((nk, tk), lambda k: (0, k)),    # support tile
                    pl.BlockSpec((tk, d), lambda k: (k, 0)),     # W tile
                    pl.BlockSpec((1, d), lambda k: (0, 0),       # bias (constant,
                                 pipeline_mode=pl.Buffered(1)),  #  single-buffered)
                    pl.BlockSpec((nk, 2 * _N_LANES), lambda k: (0, 0),
                                 pipeline_mode=pl.Buffered(1)),  # proto weights
                ],
                out_specs=pl.BlockSpec((bsz, _N_LANES), lambda k: (0, 0)),
                scratch_shapes=[pltpu.VMEM((bsz, d), jnp.float32),
                                pltpu.VMEM((nk, d), jnp.float32)],
            ),
            compiler_params=pltpu.CompilerParams(
                dimension_semantics=("arbitrary",),
                vmem_limit_bytes=vmem_limit),
            cost_estimate=cost,
        )(xq, xs, w_pad, b_vec, wpn_t)

    return out_pad[:, :n_cls]


if __name__ == "__main__":
    key = jax.random.PRNGKey(0)
    k1, k2, k3, k4 = jax.random.split(key, 4)

    B, C, H, W = 2, 3, 16, 16          # query images
    N_CLS, K_SHOT = 3, 8               # support set: 3 classes x 8 shots
    DIN = C * H * W                    # 768 (128-aligned -> single-step fast path)
    D_EMB = 128                        # embedding dim (lane-aligned)

    x = jax.random.normal(k1, (B, C, H, W), dtype=jnp.float32)
    support_imgs = jax.random.normal(k2, (N_CLS, K_SHOT, C, H, W), dtype=jnp.float32)
    # deterministic binary labels: first half of each class's shots are positive
    support_lbls = jnp.tile(
        jnp.concatenate([jnp.ones((K_SHOT // 2,)), jnp.zeros((K_SHOT - K_SHOT // 2,))]),
        (N_CLS, 1),
    ).astype(jnp.float32)

    # deterministic backbone parameters
    w_emb = jax.random.normal(k3, (DIN, D_EMB), dtype=jnp.float32) * 0.02
    b_emb = jax.random.normal(k4, (1, D_EMB), dtype=jnp.float32) * 0.01

    # one-time parameter prep, hoisted out of the per-call forward
    w_pad, b_vec = prepare_backbone_params(w_emb, b_emb)

    out = semantic_attribute_fsl_forward(x, support_imgs, support_lbls, w_pad, b_vec)
    out = jax.block_until_ready(out)

    # pure-JAX f32 reference of the same math (bf16 MXU inputs -> loose tol)
    def ref_forward(xq, s_imgs, s_lbls, w, b):
        q = xq.reshape(B, -1) @ w + b
        s = s_imgs.reshape(N_CLS * K_SHOT, -1) @ w + b
        s = s.reshape(N_CLS, K_SHOT, -1)
        m = s_lbls[..., None]
        pos = (s * m).sum(1) / jnp.maximum(m.sum(1), 1.0)
        neg = (s * (1.0 - m)).sum(1) / jnp.maximum((1.0 - m).sum(1), 1.0)
        d_pos = ((q[:, None, :] - pos[None]) ** 2).sum(-1)
        d_neg = ((q[:, None, :] - neg[None]) ** 2).sum(-1)
        return jax.nn.sigmoid(d_neg - d_pos)

    ref = ref_forward(x, support_imgs, support_lbls, w_emb, b_emb)

    assert out.shape == (B, N_CLS), out.shape
    assert bool(jnp.all(jnp.isfinite(out)))
    assert bool(jnp.all((out >= 0.0) & (out <= 1.0)))
    assert float(jnp.max(jnp.abs(out - ref))) < 0.1, float(jnp.max(jnp.abs(out - ref)))
    print("KERNEL_OK")
</pallas_src>

<mosaic_0001>
module attributes {stable_mosaic.version = 11 : i64} {
  func.func @_fsl_fused_kernel(%arg0: memref<2x768xbf16, #tpu.memory_space<vmem>>, %arg1: memref<24x768xbf16, #tpu.memory_space<vmem>>, %arg2: memref<768x128xbf16, #tpu.memory_space<vmem>>, %arg3: memref<1x128xf32, #tpu.memory_space<vmem>>, %arg4: memref<24x256xbf16, #tpu.memory_space<vmem>>, %arg5: memref<2x128xf32, #tpu.memory_space<vmem>>) attributes {dimension_semantics = [], scalar_prefetch = 0 : i64, scratch_operands = 0 : i64, tpu.core_type = #tpu.core_type<tc>} {
    %c0 = arith.constant 0 : index
    %c0_0 = arith.constant 0 : index
    %0 = vector.load %arg2[%c0, %c0_0] : memref<768x128xbf16, #tpu.memory_space<vmem>>, vector<768x128xbf16>
    %c0_1 = arith.constant 0 : index
    %c0_2 = arith.constant 0 : index
    %1 = vector.load %arg3[%c0_1, %c0_2] : memref<1x128xf32, #tpu.memory_space<vmem>>, vector<1x128xf32>
    %c0_3 = arith.constant 0 : index
    %c0_4 = arith.constant 0 : index
    %2 = vector.load %arg0[%c0_3, %c0_4] : memref<2x768xbf16, #tpu.memory_space<vmem>>, vector<2x768xbf16>
    %cst = arith.constant dense<0.000000e+00> : vector<2x128xf32>
    %3 = tpu.matmul %2, %0, %cst {dimension_numbers = #tpu.dot_dimension_numbers<[1], [0], [0], [1], [0, 0, 1, 1], [], []>} : vector<2x768xbf16>, vector<768x128xbf16>, vector<2x128xf32> -> vector<2x128xf32>
    %4 = vector.broadcast %1 : vector<1x128xf32> to vector<2x128xf32>
    %5 = arith.addf %3, %4 : vector<2x128xf32>
    %c0_5 = arith.constant 0 : index
    %c0_6 = arith.constant 0 : index
    %6 = vector.load %arg1[%c0_5, %c0_6] : memref<24x768xbf16, #tpu.memory_space<vmem>>, vector<24x768xbf16>
    %cst_7 = arith.constant dense<0.000000e+00> : vector<24x128xf32>
    %7 = tpu.matmul %6, %0, %cst_7 {dimension_numbers = #tpu.dot_dimension_numbers<[1], [0], [0], [1], [0, 0, 1, 1], [], []>} : vector<24x768xbf16>, vector<768x128xbf16>, vector<24x128xf32> -> vector<24x128xf32>
    %8 = vector.broadcast %1 : vector<1x128xf32> to vector<24x128xf32>
    %9 = arith.addf %7, %8 : vector<24x128xf32>
    %c0_8 = arith.constant 0 : index
    %c0_9 = arith.constant 0 : index
    %10 = vector.load %arg4[%c0_8, %c0_9] : memref<24x256xbf16, #tpu.memory_space<vmem>>, vector<24x256xbf16>
    %11 = arith.truncf %9 : vector<24x128xf32> to vector<24x128xbf16>
    %cst_10 = arith.constant dense<0.000000e+00> : vector<128x256xf32>
    %12 = tpu.matmul %11, %10, %cst_10 {dimension_numbers = #tpu.dot_dimension_numbers<[0], [0], [1], [1], [0, 1, 1, 1], [], []>} : vector<24x128xbf16>, vector<24x256xbf16>, vector<128x256xf32> -> vector<128x256xf32>
    %13 = vector.extract_strided_slice %12 {offsets = [0, 0], sizes = [128, 128], strides = [1, 1]} : vector<128x256xf32> to vector<128x128xf32>
    %14 = vector.extract_strided_slice %12 {offsets = [0, 128], sizes = [128, 128], strides = [1, 1]} : vector<128x256xf32> to vector<128x128xf32>
    %15 = arith.subf %13, %14 : vector<128x128xf32>
    %16 = arith.subf %14, %13 : vector<128x128xf32>
    %17 = arith.addf %14, %13 : vector<128x128xf32>
    %18 = arith.mulf %16, %17 : vector<128x128xf32>
    %cst_11 = arith.constant dense<0.000000e+00> : vector<128xf32>
    %19 = vector.multi_reduction <add>, %18, %cst_11 [0] : vector<128x128xf32> to vector<128xf32>
    %20 = vector.shape_cast %19 : vector<128xf32> to vector<1x128xf32>
    %cst_12 = arith.constant dense<0.000000e+00> : vector<2x128xf32>
    %21 = tpu.matmul %5, %15, %cst_12 {dimension_numbers = #tpu.dot_dimension_numbers<[1], [0], [0], [1], [0, 0, 1, 1], [], []>} : vector<2x128xf32>, vector<128x128xf32>, vector<2x128xf32> -> vector<2x128xf32>
    %cst_13 = arith.constant 2.000000e+00 : f32
    %22 = vector.broadcast %cst_13 : f32 to vector<2x128xf32>
    %23 = arith.mulf %22, %21 : vector<2x128xf32>
    %24 = vector.broadcast %20 : vector<1x128xf32> to vector<2x128xf32>
    %25 = arith.addf %24, %23 : vector<2x128xf32>
    %26 = arith.negf %25 : vector<2x128xf32>
    %27 = math.exp %26 : vector<2x128xf32>
    %cst_14 = arith.constant 1.000000e+00 : f32
    %28 = vector.broadcast %cst_14 : f32 to vector<2x128xf32>
    %29 = arith.addf %28, %27 : vector<2x128xf32>
    %30 = arith.divf %28, %29 : vector<2x128xf32>
    %c0_15 = arith.constant 0 : index
    %c0_16 = arith.constant 0 : index
    %31 = vector.load %arg5[%c0_15, %c0_16] : memref<2x128xf32, #tpu.memory_space<vmem>>, vector<2x128xf32>
    tpu.vector_store %arg5[%c0_15, %c0_16], %30 {strides = array<i32>} : memref<2x128xf32, #tpu.memory_space<vmem>>, vector<2x128xf32>,
    return
  }
}

</mosaic_0001>

<llo_original>
// kernel: semantic_attribute_fsl_forward.1
$region0: #{semantic_attribute_fsl_forward.1}
  #allocation0 [shape = 'u32[]', space=smem, size = 0x4, offset = 0x4, fixed_abs, tag = 'smem constant byte address 0x4 - core index']
  #allocation1 [shape = 'u32[144,128]{1,0:T(1,128)}', space=vmem, size = 0x12000, scoped, tag = 'internal scratch']
  %s0 = inlined_call_operand.vmem [shape: bf16[2,768], index: 0, kind: input, shape index: {}]
  %s1 = inlined_call_operand.vmem [shape: bf16[24,768], index: 1, kind: input, shape index: {}]
  %s2 = inlined_call_operand.vmem [shape: bf16[768,128], index: 2, kind: input, shape index: {}]
  %s3 = inlined_call_operand.vmem [shape: f32[1,128], index: 3, kind: input, shape index: {}]
  %s4 = inlined_call_operand.vmem [shape: bf16[24,256], index: 4, kind: input, shape index: {}]
  %s5 = inlined_call_operand.hbm [shape: f32[2,128], index: 5, kind: output, shape index: {}]
  %s6 = sld [smem:[#allocation0]]
  $region30: #{semantic_attribute_fsl_forward.1} parent=0
    _
  %s8 = ssub.s32 1, %s6
  %s9 = scalar_select 0, %s8, %s6
  $region1: #{semantic_attribute_fsl_forward.1} parent=0
    #allocation2 [shape = 'u8[1024]{0}', space=vmem, size = 0x400, scoped, tag = 'output window, operand 0, single buffered']
    #allocation3 [shape = 's32[1]{0}', space=sflag, size = 0x4, scoped, tag = 'scoped memory for semantic_attribute_fsl_forward.1']
    %10 = vsyncpa [#allocation3], 0
    // Predicated region
    $region2: #{semantic_attribute_fsl_forward.1} parent=1 // pred_check
      _
    $region3: #{semantic_attribute_fsl_forward.1} parent=1 // pred_check_branch
      %12 = sbr.rel (0) target = $region5
    $region4: #{semantic_attribute_fsl_forward.1} parent=1 // pred_region
      _
    $region5: #{semantic_attribute_fsl_forward.1} parent=1 // pred_fallthru
      _
    // Predicated region
    $region6: #{semantic_attribute_fsl_forward.1} parent=1 // pred_check
      _
    $region7: #{semantic_attribute_fsl_forward.1} parent=1 // pred_check_branch
      %14 = sbr.rel (0) target = $region9
    $region8: #{semantic_attribute_fsl_forward.1} parent=1 // pred_region
      _
    $region9: #{semantic_attribute_fsl_forward.1} parent=1 // pred_fallthru
      _
    // Predicated region
    $region10: #{semantic_attribute_fsl_forward.1} parent=1 // pred_check
      _
    $region11: #{semantic_attribute_fsl_forward.1} parent=1 // pred_check_branch
      %16 = sbr.rel (0) target = $region13
    $region12: #{semantic_attribute_fsl_forward.1} parent=1 // pred_region
      _
    $region13: #{semantic_attribute_fsl_forward.1} parent=1 // pred_fallthru
      _
    // Predicated region
    $region14: #{semantic_attribute_fsl_forward.1} parent=1 // pred_check
      _
    $region15: #{semantic_attribute_fsl_forward.1} parent=1 // pred_check_branch
      %18 = sbr.rel (0) target = $region17
    $region16: #{semantic_attribute_fsl_forward.1} parent=1 // pred_region
      _
    $region17: #{semantic_attribute_fsl_forward.1} parent=1 // pred_fallthru
      _
    // Predicated region
    $region18: #{semantic_attribute_fsl_forward.1} parent=1 // pred_check
      _
    $region19: #{semantic_attribute_fsl_forward.1} parent=1 // pred_check_branch
      %20 = sbr.rel (0) target = $region21
    $region20: #{semantic_attribute_fsl_forward.1} parent=1 // pred_region
      _
    $region21: #{semantic_attribute_fsl_forward.1} parent=1 // pred_fallthru
      _
    %v22 = vld [vmem:[%s2] sm:$0xf]
    %v23 = vld [vmem:[%s2 + $0x4] sm:$0xf]
    %v24 = vld [vmem:[%s2 + $0x8] sm:$0xf]
    %v25 = vld [vmem:[%s2 + $0xc] sm:$0xf]
    %v26 = vld [vmem:[%s2 + $0x10] sm:$0xf]
    %v27 = vld [vmem:[%s2 + $0x14] sm:$0xf]
    %v28 = vld [vmem:[%s2 + $0x18] sm:$0xf]
    %v29 = vld [vmem:[%s2 + $0x1c] sm:$0xf]
    %v30 = vld [vmem:[%s2 + $0x20] sm:$0xf]
    %v31 = vld [vmem:[%s2 + $0x24] sm:$0xf]
    %v32 = vld [vmem:[%s2 + $0x28] sm:$0xf]
    %v33 = vld [vmem:[%s2 + $0x2c] sm:$0xf]
    %v34 = vld [vmem:[%s2 + $0x30] sm:$0xf]
    %v35 = vld [vmem:[%s2 + $0x34] sm:$0xf]
    %v36 = vld [vmem:[%s2 + $0x38] sm:$0xf]
    %v37 = vld [vmem:[%s2 + $0x3c] sm:$0xf]
    %v38 = vld [vmem:[%s2 + $0x40] sm:$0xf]
    %v39 = vld [vmem:[%s2 + $0x44] sm:$0xf]
    %v40 = vld [vmem:[%s2 + $0x48] sm:$0xf]
    %v41 = vld [vmem:[%s2 + $0x4c] sm:$0xf]
    %v42 = vld [vmem:[%s2 + $0x50] sm:$0xf]
    %v43 = vld [vmem:[%s2 + $0x54] sm:$0xf]
    %v44 = vld [vmem:[%s2 + $0x58] sm:$0xf]
    %v45 = vld [vmem:[%s2 + $0x5c] sm:$0xf]
    %v46 = vld [vmem:[%s2 + $0x60] sm:$0xf]
    %v47 = vld [vmem:[%s2 + $0x64] sm:$0xf]
    %v48 = vld [vmem:[%s2 + $0x68] sm:$0xf]
    %v49 = vld [vmem:[%s2 + $0x6c] sm:$0xf]
    %v50 = vld [vmem:[%s2 + $0x70] sm:$0xf]
    %v51 = vld [vmem:[%s2 + $0x74] sm:$0xf]
    %v52 = vld [vmem:[%s2 + $0x78] sm:$0xf]
    %v53 = vld [vmem:[%s2 + $0x7c] sm:$0xf]
    %v54 = vld [vmem:[%s2 + $0x80] sm:$0xf]
    %v55 = vld [vmem:[%s2 + $0x84] sm:$0xf]
    %v56 = vld [vmem:[%s2 + $0x88] sm:$0xf]
    %v57 = vld [vmem:[%s2 + $0x8c] sm:$0xf]
    %v58 = vld [vmem:[%s2 + $0x90] sm:$0xf]
    %v59 = vld [vmem:[%s2 + $0x94] sm:$0xf]
    %v60 = vld [vmem:[%s2 + $0x98] sm:$0xf]
    %v61 = vld [vmem:[%s2 + $0x9c] sm:$0xf]
    %v62 = vld [vmem:[%s2 + $0xa0] sm:$0xf]
    %v63 = vld [vmem:[%s2 + $0xa4] sm:$0xf]
    %v64 = vld [vmem:[%s2 + $0xa8] sm:$0xf]
    %v65 = vld [vmem:[%s2 + $0xac] sm:$0xf]
    %v66 = vld [vmem:[%s2 + $0xb0] sm:$0xf]
    %v67 = vld [vmem:[%s2 + $0xb4] sm:$0xf]
    %v68 = vld [vmem:[%s2 + $0xb8] sm:$0xf]
    %v69 = vld [vmem:[%s2 + $0xbc] sm:$0xf]
    %v70 = vld [vmem:[%s2 + $0xc0] sm:$0xf]
    %v71 = vld [vmem:[%s2 + $0xc4] sm:$0xf]
    %v72 = vld [vmem:[%s2 + $0xc8] sm:$0xf]
    %v73 = vld [vmem:[%s2 + $0xcc] sm:$0xf]
    %v74 = vld [vmem:[%s2 + $0xd0] sm:$0xf]
    %v75 = vld [vmem:[%s2 + $0xd4] sm:$0xf]
    %v76 = vld [vmem:[%s2 + $0xd8] sm:$0xf]
    %v77 = vld [vmem:[%s2 + $0xdc] sm:$0xf]
    %v78 = vld [vmem:[%s2 + $0xe0] sm:$0xf]
    %v79 = vld [vmem:[%s2 + $0xe4] sm:$0xf]
    %v80 = vld [vmem:[%s2 + $0xe8] sm:$0xf]
    %v81 = vld [vmem:[%s2 + $0xec] sm:$0xf]
    %v82 = vld [vmem:[%s2 + $0xf0] sm:$0xf]
    %v83 = vld [vmem:[%s2 + $0xf4] sm:$0xf]
    %v84 = vld [vmem:[%s2 + $0xf8] sm:$0xf]
    %v85 = vld [vmem:[%s2 + $0xfc] sm:$0xf]
    %v86 = vld [vmem:[%s2 + $0x100] sm:$0xf]
    %v87 = vld [vmem:[%s2 + $0x104] sm:$0xf]
    %v88 = vld [vmem:[%s2 + $0x108] sm:$0xf]
    %v89 = vld [vmem:[%s2 + $0x10c] sm:$0xf]
    %v90 = vld [vmem:[%s2 + $0x110] sm:$0xf]
    %v91 = vld [vmem:[%s2 + $0x114] sm:$0xf]
    %v92 = vld [vmem:[%s2 + $0x118] sm:$0xf]
    %v93 = vld [vmem:[%s2 + $0x11c] sm:$0xf]
    %v94 = vld [vmem:[%s2 + $0x120] sm:$0xf]
    %v95 = vld [vmem:[%s2 + $0x124] sm:$0xf]
    %v96 = vld [vmem:[%s2 + $0x128] sm:$0xf]
    %v97 = vld [vmem:[%s2 + $0x12c] sm:$0xf]
    %v98 = vld [vmem:[%s2 + $0x130] sm:$0xf]
    %v99 = vld [vmem:[%s2 + $0x134] sm:$0xf]
    %v100 = vld [vmem:[%s2 + $0x138] sm:$0xf]
    %v101 = vld [vmem:[%s2 + $0x13c] sm:$0xf]
    %v102 = vld [vmem:[%s2 + $0x140] sm:$0xf]
    %v103 = vld [vmem:[%s2 + $0x144] sm:$0xf]
    %v104 = vld [vmem:[%s2 + $0x148] sm:$0xf]
    %v105 = vld [vmem:[%s2 + $0x14c] sm:$0xf]
    %v106 = vld [vmem:[%s2 + $0x150] sm:$0xf]
    %v107 = vld [vmem:[%s2 + $0x154] sm:$0xf]
    %v108 = vld [vmem:[%s2 + $0x158] sm:$0xf]
    %v109 = vld [vmem:[%s2 + $0x15c] sm:$0xf]
    %v110 = vld [vmem:[%s2 + $0x160] sm:$0xf]
    %v111 = vld [vmem:[%s2 + $0x164] sm:$0xf]
    %v112 = vld [vmem:[%s2 + $0x168] sm:$0xf]
    %v113 = vld [vmem:[%s2 + $0x16c] sm:$0xf]
    %v114 = vld [vmem:[%s2 + $0x170] sm:$0xf]
    %v115 = vld [vmem:[%s2 + $0x174] sm:$0xf]
    %v116 = vld [vmem:[%s2 + $0x178] sm:$0xf]
    %v117 = vld [vmem:[%s2 + $0x17c] sm:$0xf]
    %v118 = vld [vmem:[%s3] sm:$0x1]
    %v119 = vld [vmem:[%s0] sm:$0x3f]
    %v121 = vlaneseq
    %v122 = vshrl.u32 %v121, 7
    %v123 = vsub.s32 0, %v122
    %v124 = vrot.slane %v118, %v123
    %v127 = vcombine.high %v119, %v119
    %v129 = vunpack.c.l.s4 1966171168
    %v130 = vunpack.c.0.s8 %v129
    %v131 = vlaneseq
    %v132 = vshrl.u32 %v131, 7
    %v133 = vsub.s32 %v130, %v132
    %v134 = vrot.slane %v119, %v133
    %v136 = vunpack.c.l.s4 1966171168
    %v137 = vunpack.c.0.s8 %v136
    %v138 = vlaneseq
    %v139 = vshrl.u32 %v138, 7
    %v140 = vsub.s32 %v137, %v139
    %v141 = vrot.slane %v127, %v140
    %v142 = vcombine.high %v134, %v134
    %v143 = vcombine.high %v141, %v141
    %v145 = vunpack.c.l.s4 1966171168
    %v146 = vunpack.c.0.s8 %v145
    %v147 = vlaneseq
    %v148 = vshrl.u32 %v147, 7
    %v149 = vsub.s32 %v146, %v148
    %v150 = vrot.slane %v134, %v149
    %v152 = vunpack.c.l.s4 1966171168
    %v153 = vunpack.c.0.s8 %v152
    %v154 = vlaneseq
    %v155 = vshrl.u32 %v154, 7
    %v156 = vsub.s32 %v153, %v155
    %v157 = vrot.slane %v141, %v156
    %v159 = vunpack.c.l.s4 1966171168
    %v160 = vunpack.c.0.s8 %v159
    %v161 = vlaneseq
    %v162 = vshrl.u32 %v161, 7
    %v163 = vsub.s32 %v160, %v162
    %v164 = vrot.slane %v142, %v163
    %v166 = vunpack.c.l.s4 1966171168
    %v167 = vunpack.c.0.s8 %v166
    %v168 = vlaneseq
    %v169 = vshrl.u32 %v168, 7
    %v170 = vsub.s32 %v167, %v169
    %v171 = vrot.slane %v143, %v170
    %v172 = vcombine.high %v150, %v150
    %v173 = vcombine.high %v164, %v164
    %v276 = vunpack.c.l.b16 %v22
    %v277 = vunpack.c.l.b16 %v23
    %v278 = vunpack.c.l.b16 %v24
    %v279 = vunpack.c.l.b16 %v25
    %v280 = vunpack.c.l.b16 %v26
    %v281 = vunpack.c.l.b16 %v27
    %v282 = vunpack.c.l.b16 %v28
    %v283 = vunpack.c.l.b16 %v29
    %v284 = vunpack.c.l.b16 %v30
    %v285 = vunpack.c.l.b16 %v31
    %v286 = vunpack.c.l.b16 %v32
    %v287 = vunpack.c.l.b16 %v33
    %v288 = vunpack.c.l.b16 %v34
    %v289 = vunpack.c.l.b16 %v35
    %v290 = vunpack.c.l.b16 %v36
    %v291 = vunpack.c.l.b16 %v37
    %v292 = vunpack.c.l.b16 %v38
    %v293 = vunpack.c.l.b16 %v39
    %v294 = vunpack.c.l.b16 %v40
    %v295 = vunpack.c.l.b16 %v41
    %v296 = vunpack.c.l.b16 %v42
    %v297 = vunpack.c.l.b16 %v43
    %v298 = vunpack.c.l.b16 %v44
    %v299 = vunpack.c.l.b16 %v45
    %v300 = vunpack.c.l.b16 %v46
    %v301 = vunpack.c.l.b16 %v47
    %v302 = vunpack.c.l.b16 %v48
    %v303 = vunpack.c.l.b16 %v49
    %v304 = vunpack.c.l.b16 %v50
    %v305 = vunpack.c.l.b16 %v51
    %v306 = vunpack.c.l.b16 %v52
    %v307 = vunpack.c.l.b16 %v53
    %v308 = vunpack.c.l.b16 %v54
    %v309 = vunpack.c.l.b16 %v55
    %v310 = vunpack.c.l.b16 %v56
    %v311 = vunpack.c.l.b16 %v57
    %v312 = vunpack.c.l.b16 %v58
    %v313 = vunpack.c.l.b16 %v59
    %v314 = vunpack.c.l.b16 %v60
    %v315 = vunpack.c.l.b16 %v61
    %v316 = vunpack.c.l.b16 %v62
    %v317 = vunpack.c.l.b16 %v63
    %v318 = vunpack.c.l.b16 %v64
    %v319 = vunpack.c.l.b16 %v65
    %v320 = vunpack.c.l.b16 %v66
    %v321 = vunpack.c.l.b16 %v67
    %v322 = vunpack.c.l.b16 %v68
    %v323 = vunpack.c.l.b16 %v69
    %v324 = vunpack.c.l.b16 %v70
    %v325 = vunpack.c.l.b16 %v71
    %v326 = vunpack.c.l.b16 %v72
    %v327 = vunpack.c.l.b16 %v73
    %v328 = vunpack.c.l.b16 %v74
    %v329 = vunpack.c.l.b16 %v75
    %v330 = vunpack.c.l.b16 %v76
    %v331 = vunpack.c.l.b16 %v77
    %v332 = vunpack.c.l.b16 %v78
    %v333 = vunpack.c.l.b16 %v79
    %v334 = vunpack.c.l.b16 %v80
    %v335 = vunpack.c.l.b16 %v81
    %v336 = vunpack.c.l.b16 %v82
    %v337 = vunpack.c.l.b16 %v83
    %v338 = vunpack.c.l.b16 %v84
    %v339 = vunpack.c.l.b16 %v85
    %v340 = vunpack.c.l.b16 %v86
    %v341 = vunpack.c.l.b16 %v87
    %v342 = vunpack.c.l.b16 %v88
    %v343 = vunpack.c.l.b16 %v89
    %v344 = vunpack.c.l.b16 %v90
    %v345 = vunpack.c.l.b16 %v91
    %v346 = vunpack.c.l.b16 %v92
    %v347 = vunpack.c.l.b16 %v93
    %v348 = vunpack.c.l.b16 %v94
    %v349 = vunpack.c.l.b16 %v95
    %v350 = vunpack.c.l.b16 %v96
    %v351 = vunpack.c.l.b16 %v97
    %v352 = vunpack.c.l.b16 %v98
    %v353 = vunpack.c.l.b16 %v99
    %v354 = vunpack.c.l.b16 %v100
    %v355 = vunpack.c.l.b16 %v101
    %v356 = vunpack.c.l.b16 %v102
    %v357 = vunpack.c.l.b16 %v103
    %v358 = vunpack.c.l.b16 %v104
    %v359 = vunpack.c.l.b16 %v105
    %v360 = vunpack.c.l.b16 %v106
    %v361 = vunpack.c.l.b16 %v107
    %v362 = vunpack.c.l.b16 %v108
    %v363 = vunpack.c.l.b16 %v109
    %v364 = vunpack.c.l.b16 %v110
    %v365 = vunpack.c.l.b16 %v111
    %v366 = vunpack.c.l.b16 %v112
    %v367 = vunpack.c.l.b16 %v113
    %v368 = vunpack.c.l.b16 %v114
    %v369 = vunpack.c.l.b16 %v115
    %v370 = vunpack.c.l.b16 %v116
    %v371 = vunpack.c.l.b16 %v117
    %v372 = vpack.c.b16 %v277, %v276
    %v373 = vpack.c.b16 %v279, %v278
    %v374 = vpack.c.b16 %v281, %v280
    %v375 = vpack.c.b16 %v283, %v282
    %v376 = vpack.c.b16 %v285, %v284
    %v377 = vpack.c.b16 %v287, %v286
    %v378 = vpack.c.b16 %v289, %v288
    %v379 = vpack.c.b16 %v291, %v290
    %v380 = vpack.c.b16 %v293, %v292
    %v381 = vpack.c.b16 %v295, %v294
    %v382 = vpack.c.b16 %v297, %v296
    %v383 = vpack.c.b16 %v299, %v298
    %v384 = vpack.c.b16 %v301, %v300
    %v385 = vpack.c.b16 %v303, %v302
    %v386 = vpack.c.b16 %v305, %v304
    %v387 = vpack.c.b16 %v307, %v306
    %v388 = vpack.c.b16 %v309, %v308
    %v389 = vpack.c.b16 %v311, %v310
    %v390 = vpack.c.b16 %v313, %v312
    %v391 = vpack.c.b16 %v315, %v314
    %v392 = vpack.c.b16 %v317, %v316
    %v393 = vpack.c.b16 %v319, %v318
    %v394 = vpack.c.b16 %v321, %v320
    %v395 = vpack.c.b16 %v323, %v322
    %v396 = vpack.c.b16 %v325, %v324
    %v397 = vpack.c.b16 %v327, %v326
    %v398 = vpack.c.b16 %v329, %v328
    %v399 = vpack.c.b16 %v331, %v330
    %v400 = vpack.c.b16 %v333, %v332
    %v401 = vpack.c.b16 %v335, %v334
    %v402 = vpack.c.b16 %v337, %v336
    %v403 = vpack.c.b16 %v339, %v338
    %v404 = vpack.c.b16 %v341, %v340
    %v405 = vpack.c.b16 %v343, %v342
    %v406 = vpack.c.b16 %v345, %v344
    %v407 = vpack.c.b16 %v347, %v346
    %v408 = vpack.c.b16 %v349, %v348
    %v409 = vpack.c.b16 %v351, %v350
    %v410 = vpack.c.b16 %v353, %v352
    %v411 = vpack.c.b16 %v355, %v354
    %v412 = vpack.c.b16 %v357, %v356
    %v413 = vpack.c.b16 %v359, %v358
    %v414 = vpack.c.b16 %v361, %v360
    %v415 = vpack.c.b16 %v363, %v362
    %v416 = vpack.c.b16 %v365, %v364
    %v417 = vpack.c.b16 %v367, %v366
    %v418 = vpack.c.b16 %v369, %v368
    %v419 = vpack.c.b16 %v371, %v370
    %468 = vmatprep.subr.bf16.mxu0 0
    %469 = vmatpush1.bf16.msra.mxu0 %v379
    %470 = vmatprep.subr.bf16.mxu0 0
    %471 = vmatpush1.bf16.msra.mxu0 %v378
    %472 = vmatprep.subr.bf16.mxu0 0
    %473 = vmatpush1.bf16.msra.mxu0 %v377
    %474 = vmatprep.subr.bf16.mxu0 0
    %475 = vmatpush1.bf16.msra.mxu0 %v376
    %476 = vmatprep.subr.bf16.mxu0 0
    %477 = vmatpush1.bf16.msra.mxu0 %v375
    %478 = vmatprep.subr.bf16.mxu0 0
    %479 = vmatpush1.bf16.msra.mxu0 %v374
    %480 = vmatprep.subr.bf16.mxu0 0
    %481 = vmatpush1.bf16.msra.mxu0 %v373
    %482 = vmatprep.subr.bf16.mxu0 0
    %483 = vmatpush1.bf16.msra.mxu0 %v372
    %484 = vmatprep.subr.bf16.mxu0 0
    %485 = vmatpush2.bf16.msra.mxu0 %v387
    %486 = vmatprep.subr.bf16.mxu0 0
    %487 = vmatpush2.bf16.msra.mxu0 %v386
    %488 = vmatprep.subr.bf16.mxu0 0
    %489 = vmatpush2.bf16.msra.mxu0 %v385
    %490 = vmatprep.subr.bf16.mxu0 0
    %491 = vmatpush2.bf16.msra.mxu0 %v384
    %492 = vmatprep.subr.bf16.mxu0 0
    %493 = vmatpush2.bf16.msra.mxu0 %v383
    %494 = vmatprep.subr.bf16.mxu0 0
    %495 = vmatpush2.bf16.msra.mxu0 %v382
    %496 = vmatprep.subr.bf16.mxu0 0
    %497 = vmatpush2.bf16.msra.mxu0 %v381
    %498 = vmatprep.subr.bf16.mxu0 0
    %499 = vmatpush2.bf16.msra.mxu0 %v380
    %500 = vmatprep.mubr.bf16.mxu0 %v164
    %501 = vmatmul.mubr.bf16.gmra.mxu0 %v150
    %v502 = vpop.f32.mrf.mxu0
    %v503 = vadd.f32 %v124, %v502
    %v504 = vpop.f32.mrf.mxu0
    %v505 = vpop.f32.mrf.mxu0
    %v506 = vpop.f32.mrf.mxu0
    %507 = vdwg.mxu0
    %508 = vmatprep.subr.bf16.mxu0 0
    %509 = vmatpush1.bf16.msra.mxu0 %v395
    %510 = vmatprep.subr.bf16.mxu0 0
    %511 = vmatpush1.bf16.msra.mxu0 %v394
    %512 = vmatprep.subr.bf16.mxu0 0
    %513 = vmatpush1.bf16.msra.mxu0 %v393
    %514 = vmatprep.subr.bf16.mxu0 0
    %515 = vmatpush1.bf16.msra.mxu0 %v392
    %516 = vmatprep.subr.bf16.mxu0 0
    %517 = vmatpush1.bf16.msra.mxu0 %v391
    %518 = vmatprep.subr.bf16.mxu0 0
    %519 = vmatpush1.bf16.msra.mxu0 %v390
    %520 = vmatprep.subr.bf16.mxu0 0
    %521 = vmatpush1.bf16.msra.mxu0 %v389
    %522 = vmatprep.subr.bf16.mxu0 0
    %523 = vmatpush1.bf16.msra.mxu0 %v388
    %524 = vmatprep.subr.bf16.mxu0 0
    %525 = vmatpush2.bf16.msra.mxu0 %v403
    %526 = vmatprep.subr.bf16.mxu0 0
    %527 = vmatpush2.bf16.msra.mxu0 %v402
    %528 = vmatprep.subr.bf16.mxu0 0
    %529 = vmatpush2.bf16.msra.mxu0 %v401
    %530 = vmatprep.subr.bf16.mxu0 0
    %531 = vmatpush2.bf16.msra.mxu0 %v400
    %532 = vmatprep.subr.bf16.mxu0 0
    %533 = vmatpush2.bf16.msra.mxu0 %v399
    %534 = vmatprep.subr.bf16.mxu0 0
    %535 = vmatpush2.bf16.msra.mxu0 %v398
    %536 = vmatprep.subr.bf16.mxu0 0
    %537 = vmatpush2.bf16.msra.mxu0 %v397
    %538 = vmatprep.subr.bf16.mxu0 0
    %539 = vmatpush2.bf16.msra.mxu0 %v396
    %540 = vmatprep.mubr.bf16.mxu0 %v173
    %541 = vmatmul.mubr.bf16.gmra.mxu0 %v172
    %v542 = vpop.f32.mrf.mxu0
    %v543 = vadd.f32 %v503, %v542
    %v544 = vpop.f32.mrf.mxu0
    %v545 = vpop.f32.mrf.mxu0
    %v546 = vpop.f32.mrf.mxu0
    %547 = vdwg.mxu0
    %548 = vmatprep.subr.bf16.mxu0 0
    %549 = vmatpush1.bf16.msra.mxu0 %v411
    %550 = vmatprep.subr.bf16.mxu0 0
    %551 = vmatpush1.bf16.msra.mxu0 %v410
    %552 = vmatprep.subr.bf16.mxu0 0
    %553 = vmatpush1.bf16.msra.mxu0 %v409
    %554 = vmatprep.subr.bf16.mxu0 0
    %555 = vmatpush1.bf16.msra.mxu0 %v408
    %556 = vmatprep.subr.bf16.mxu0 0
    %557 = vmatpush1.bf16.msra.mxu0 %v407
    %558 = vmatprep.subr.bf16.mxu0 0
    %559 = vmatpush1.bf16.msra.mxu0 %v406
    %560 = vmatprep.subr.bf16.mxu0 0
    %561 = vmatpush1.bf16.msra.mxu0 %v405
    %562 = vmatprep.subr.bf16.mxu0 0
    %563 = vmatpush1.bf16.msra.mxu0 %v404
    %564 = vmatprep.subr.bf16.mxu0 0
    %565 = vmatpush2.bf16.msra.mxu0 %v419
    %566 = vmatprep.subr.bf16.mxu0 0
    %567 = vmatpush2.bf16.msra.mxu0 %v418
    %568 = vmatprep.subr.bf16.mxu0 0
    %569 = vmatpush2.bf16.msra.mxu0 %v417
    %570 = vmatprep.subr.bf16.mxu0 0
    %571 = vmatpush2.bf16.msra.mxu0 %v416
    %572 = vmatprep.subr.bf16.mxu0 0
    %573 = vmatpush2.bf16.msra.mxu0 %v415
    %574 = vmatprep.subr.bf16.mxu0 0
    %575 = vmatpush2.bf16.msra.mxu0 %v414
    %576 = vmatprep.subr.bf16.mxu0 0
    %577 = vmatpush2.bf16.msra.mxu0 %v413
    %578 = vmatprep.subr.bf16.mxu0 0
    %579 = vmatpush2.bf16.msra.mxu0 %v412
    %580 = vmatprep.mubr.bf16.mxu0 %v171
    %581 = vmatmul.mubr.bf16.gmra.mxu0 %v157
    %v582 = vpop.f32.mrf.mxu0
    %v583 = vadd.f32 %v543, %v582
    %v584 = vpop.f32.mrf.mxu0
    %v585 = vpop.f32.mrf.mxu0
    %v586 = vpop.f32.mrf.mxu0
    %587 = vdwg.mxu0
    %v588 = vld [vmem:[%s1] sm:$0xff]
    %v589 = vld [vmem:[%s1 + $0x8] sm:$0xff]
    %v590 = vld [vmem:[%s1 + $0x10] sm:$0xff]
    %v591 = vld [vmem:[%s1 + $0x18] sm:$0xff]
    %v592 = vld [vmem:[%s1 + $0x20] sm:$0xff]
    %v593 = vld [vmem:[%s1 + $0x28] sm:$0xff]
    %v594 = vld [vmem:[%s1 + $0x30] sm:$0xff]
    %v595 = vld [vmem:[%s1 + $0x38] sm:$0xff]
    %v596 = vld [vmem:[%s1 + $0x40] sm:$0xff]
    %v606 = vunpack.c.l.b16 %v588
    %v607 = vunpack.c.h.b16 %v588
    %v608 = vunpack.c.l.b16 %v589
    %v609 = vunpack.c.h.b16 %v589
    %v610 = vunpack.c.l.b16 %v590
    %v611 = vunpack.c.h.b16 %v590
    %v612 = vunpack.c.l.b16 %v591
    %v613 = vunpack.c.h.b16 %v591
    %v614 = vunpack.c.l.b16 %v592
    %v615 = vunpack.c.h.b16 %v592
    %v616 = vunpack.c.l.b16 %v593
    %v617 = vunpack.c.h.b16 %v593
    %v618 = vunpack.c.l.b16 %v594
    %v619 = vunpack.c.h.b16 %v594
    %v620 = vunpack.c.l.b16 %v595
    %v621 = vunpack.c.h.b16 %v595
    %v622 = vunpack.c.l.b16 %v596
    %v623 = vunpack.c.h.b16 %v596
    %v624 = vpack.c.b16 %v612, %v606
    %v625 = vpack.c.b16 %v613, %v607
    %v626 = vpack.c.b16 %v614, %v608
    %v627 = vpack.c.b16 %v615, %v609
    %v628 = vpack.c.b16 %v616, %v610
    %v629 = vpack.c.b16 %v617, %v611
    %v630 = vpack.c.b16 %v618, %v618
    %v631 = vpack.c.b16 %v619, %v619
    %v632 = vpack.c.b16 %v620, %v620
    %v633 = vpack.c.b16 %v621, %v621
    %v634 = vpack.c.b16 %v622, %v622
    %v635 = vpack.c.b16 %v623, %v623
    %648 = vmatprep.subr.bf16.mxu0 0
    %649 = vmatpush1.bf16.msra.mxu0 %v379
    %650 = vmatprep.subr.bf16.mxu0 0
    %651 = vmatpush1.bf16.msra.mxu0 %v378
    %652 = vmatprep.subr.bf16.mxu0 0
    %653 = vmatpush1.bf16.msra.mxu0 %v377
    %654 = vmatprep.subr.bf16.mxu0 0
    %655 = vmatpush1.bf16.msra.mxu0 %v376
    %656 = vmatprep.subr.bf16.mxu0 0
    %657 = vmatpush1.bf16.msra.mxu0 %v375
    %658 = vmatprep.subr.bf16.mxu0 0
    %659 = vmatpush1.bf16.msra.mxu0 %v374
    %660 = vmatprep.subr.bf16.mxu0 0
    %661 = vmatpush1.bf16.msra.mxu0 %v373
    %662 = vmatprep.subr.bf16.mxu0 0
    %663 = vmatpush1.bf16.msra.mxu0 %v372
    %664 = vmatprep.subr.bf16.mxu0 0
    %665 = vmatpush2.bf16.msra.mxu0 %v387
    %666 = vmatprep.subr.bf16.mxu0 0
    %667 = vmatpush2.bf16.msra.mxu0 %v386
    %668 = vmatprep.subr.bf16.mxu0 0
    %669 = vmatpush2.bf16.msra.mxu0 %v385
    %670 = vmatprep.subr.bf16.mxu0 0
    %671 = vmatpush2.bf16.msra.mxu0 %v384
    %672 = vmatprep.subr.bf16.mxu0 0
    %673 = vmatpush2.bf16.msra.mxu0 %v383
    %674 = vmatprep.subr.bf16.mxu0 0
    %675 = vmatpush2.bf16.msra.mxu0 %v382
    %676 = vmatprep.subr.bf16.mxu0 0
    %677 = vmatpush2.bf16.msra.mxu0 %v381
    %678 = vmatprep.subr.bf16.mxu0 0
    %679 = vmatpush2.bf16.msra.mxu0 %v380
    %680 = vmatprep.mubr.bf16.mxu0 %v625
    %681 = vmatmul.mubr.bf16.gmra.mxu0 %v624
    %v682 = vpop.f32.mrf.mxu0
    %v683 = vadd.f32 %v124, %v682
    %v684 = vpop.f32.mrf.mxu0
    %v685 = vpop.f32.mrf.mxu0
    %v686 = vadd.f32 %v124, %v685
    %v687 = vpop.f32.mrf.mxu0
    %688 = vmatprep.mubr.bf16.mxu0 %v631
    %689 = vmatmul.mubr.bf16.gmra.mxu0 %v630
    %v690 = vpop.f32.mrf.mxu0
    %v691 = vadd.f32 %v124, %v690
    %v692 = vpop.f32.mrf.mxu0
    %v693 = vpop.f32.mrf.mxu0
    %v694 = vpop.f32.mrf.mxu0
    %695 = vdwg.mxu0
    %696 = vmatprep.subr.bf16.mxu0 0
    %697 = vmatpush1.bf16.msra.mxu0 %v395
    %698 = vmatprep.subr.bf16.mxu0 0
    %699 = vmatpush1.bf16.msra.mxu0 %v394
    %700 = vmatprep.subr.bf16.mxu0 0
    %701 = vmatpush1.bf16.msra.mxu0 %v393
    %702 = vmatprep.subr.bf16.mxu0 0
    %703 = vmatpush1.bf16.msra.mxu0 %v392
    %704 = vmatprep.subr.bf16.mxu0 0
    %705 = vmatpush1.bf16.msra.mxu0 %v391
    %706 = vmatprep.subr.bf16.mxu0 0
    %707 = vmatpush1.bf16.msra.mxu0 %v390
    %708 = vmatprep.subr.bf16.mxu0 0
    %709 = vmatpush1.bf16.msra.mxu0 %v389
    %710 = vmatprep.subr.bf16.mxu0 0
    %711 = vmatpush1.bf16.msra.mxu0 %v388
    %712 = vmatprep.subr.bf16.mxu0 0
    %713 = vmatpush2.bf16.msra.mxu0 %v403
    %714 = vmatprep.subr.bf16.mxu0 0
    %715 = vmatpush2.bf16.msra.mxu0 %v402
    %716 = vmatprep.subr.bf16.mxu0 0
    %717 = vmatpush2.bf16.msra.mxu0 %v401
    %718 = vmatprep.subr.bf16.mxu0 0
    %719 = vmatpush2.bf16.msra.mxu0 %v400
    %720 = vmatprep.subr.bf16.mxu0 0
    %721 = vmatpush2.bf16.msra.mxu0 %v399
    %722 = vmatprep.subr.bf16.mxu0 0
    %723 = vmatpush2.bf16.msra.mxu0 %v398
    %724 = vmatprep.subr.bf16.mxu0 0
    %725 = vmatpush2.bf16.msra.mxu0 %v397
    %726 = vmatprep.subr.bf16.mxu0 0
    %727 = vmatpush2.bf16.msra.mxu0 %v396
    %728 = vmatprep.mubr.bf16.mxu0 %v627
    %729 = vmatmul.mubr.bf16.gmra.mxu0 %v626
    %v730 = vpop.f32.mrf.mxu0
    %v731 = vadd.f32 %v683, %v730
    %v732 = vpop.f32.mrf.mxu0
    %v733 = vpop.f32.mrf.mxu0
    %v734 = vadd.f32 %v686, %v733
    %v735 = vpop.f32.mrf.mxu0
    %736 = vmatprep.mubr.bf16.mxu0 %v633
    %737 = vmatmul.mubr.bf16.gmra.mxu0 %v632
    %v738 = vpop.f32.mrf.mxu0
    %v739 = vadd.f32 %v691, %v738
    %v740 = vpop.f32.mrf.mxu0
    %v741 = vpop.f32.mrf.mxu0
    %v742 = vpop.f32.mrf.mxu0
    %743 = vdwg.mxu0
    %744 = vmatprep.subr.bf16.mxu0 0
    %745 = vmatpush1.bf16.msra.mxu0 %v411
    %746 = vmatprep.subr.bf16.mxu0 0
    %747 = vmatpush1.bf16.msra.mxu0 %v410
    %748 = vmatprep.subr.bf16.mxu0 0
    %749 = vmatpush1.bf16.msra.mxu0 %v409
    %750 = vmatprep.subr.bf16.mxu0 0
    %751 = vmatpush1.bf16.msra.mxu0 %v408
    %752 = vmatprep.subr.bf16.mxu0 0
    %753 = vmatpush1.bf16.msra.mxu0 %v407
    %754 = vmatprep.subr.bf16.mxu0 0
    %755 = vmatpush1.bf16.msra.mxu0 %v406
    %756 = vmatprep.subr.bf16.mxu0 0
    %757 = vmatpush1.bf16.msra.mxu0 %v405
    %758 = vmatprep.subr.bf16.mxu0 0
    %759 = vmatpush1.bf16.msra.mxu0 %v404
    %760 = vmatprep.subr.bf16.mxu0 0
    %761 = vmatpush2.bf16.msra.mxu0 %v419
    %762 = vmatprep.subr.bf16.mxu0 0
    %763 = vmatpush2.bf16.msra.mxu0 %v418
    %764 = vmatprep.subr.bf16.mxu0 0
    %765 = vmatpush2.bf16.msra.mxu0 %v417
    %766 = vmatprep.subr.bf16.mxu0 0
    %767 = vmatpush2.bf16.msra.mxu0 %v416
    %768 = vmatprep.subr.bf16.mxu0 0
    %769 = vmatpush2.bf16.msra.mxu0 %v415
    %770 = vmatprep.subr.bf16.mxu0 0
    %771 = vmatpush2.bf16.msra.mxu0 %v414
    %772 = vmatprep.subr.bf16.mxu0 0
    %773 = vmatpush2.bf16.msra.mxu0 %v413
    %774 = vmatprep.subr.bf16.mxu0 0
    %775 = vmatpush2.bf16.msra.mxu0 %v412
    %776 = vmatprep.mubr.bf16.mxu0 %v629
    %777 = vmatmul.mubr.bf16.gmra.mxu0 %v628
    %v778 = vpop.f32.mrf.mxu0
    %v779 = vadd.f32 %v731, %v778
    %v780 = vpop.f32.mrf.mxu0
    %v781 = vpop.f32.mrf.mxu0
    %v782 = vadd.f32 %v734, %v781
    %v783 = vpop.f32.mrf.mxu0
    %784 = vmatprep.mubr.bf16.mxu0 %v635
    %785 = vmatmul.mubr.bf16.gmra.mxu0 %v634
    %v786 = vpop.f32.mrf.mxu0
    %v787 = vadd.f32 %v739, %v786
    %v788 = vpop.f32.mrf.mxu0
    %v789 = vpop.f32.mrf.mxu0
    %v790 = vpop.f32.mrf.mxu0
    %791 = vdwg.mxu0
    %v792 = vld [vmem:[%s4] sm:$0xff]
    %v793 = vld [vmem:[%s4 + $0x8] sm:$0xff]
    %v794 = vld [vmem:[%s4 + $0x10] sm:$0xff]
    %v795 = vpack.c.bf16 %v782, %v779
    %v796 = vpack.c.bf16 %v787, %v787
    %797 = vxpose.xlu0.c.b16.start [1/8] %v795, 128
    %798 = vxpose.xlu0.c.b16.cont [2/8] %v796, 128
    %799 = vxpose.xlu0.c.b16.cont [3/8] 0, 128
    %800 = vxpose.xlu0.c.b16.cont [4/8] 0, 128
    %801 = vxpose.xlu0.c.b16.cont [5/8] 0, 128
    %802 = vxpose.xlu0.c.b16.cont [6/8] 0, 128
    %803 = vxpose.xlu0.c.b16.cont [7/8] 0, 128
    %804 = vxpose.xlu0.c.b16.end [8/8] 0, 128
    %v805 = vpop.trf.xlu0
    %v806 = vpop.trf.xlu0
    %v807 = vpop.trf.xlu0
    %v808 = vpop.trf.xlu0
    %v809 = vpop.trf.xlu0
    %v810 = vpop.trf.xlu0
    %v811 = vpop.trf.xlu0
    %v812 = vpop.trf.xlu0
    %v816 = vunpack.c.l.b16 %v792
    %v817 = vunpack.c.h.b16 %v792
    %v818 = vunpack.c.l.b16 %v793
    %v819 = vunpack.c.h.b16 %v793
    %v820 = vunpack.c.l.b16 %v794
    %v821 = vunpack.c.h.b16 %v794
    %v822 = vpack.c.b16 %v818, %v816
    %v823 = vpack.c.b16 %v819, %v817
    %v824 = vpack.c.b16 %v820, %v820
    %v825 = vpack.c.b16 %v821, %v821
    %vm828 = vcmask 195584
    %v830 = vsel %vm828, %v805, 0
    %v833 = vsel %vm828, %v806, 0
    %v836 = vsel %vm828, %v807, 0
    %v839 = vsel %vm828, %v808, 0
    %v842 = vsel %vm828, %v809, 0
    %v845 = vsel %vm828, %v810, 0
    %v848 = vsel %vm828, %v811, 0
    %v851 = vsel %vm828, %v812, 0
    %vm853 = vcmask 1043456
    %v855 = vsel %vm853, %v824, 0
    %v858 = vsel %vm853, %v825, 0
    %860 = vmatprep.subr.bf16.mxu0 0
    %861 = vmatpush1.bf16.msra.mxu0 0
    %862 = vmatprep.subr.bf16.mxu0 0
    %863 = vmatpush1.bf16.msra.mxu0 0
    %864 = vmatprep.subr.bf16.mxu0 0
    %865 = vmatpush1.bf16.msra.mxu0 0
    %866 = vmatprep.subr.bf16.mxu0 0
    %867 = vmatpush1.bf16.msra.mxu0 0
    %868 = vmatprep.subr.bf16.mxu0 0
    %869 = vmatpush1.bf16.msra.mxu0 0
    %870 = vmatprep.subr.bf16.mxu0 0
    %871 = vmatpush1.bf16.msra.mxu0 0
    %872 = vmatprep.subr.bf16.mxu0 %v858
    %873 = vmatpush1.bf16.msra.mxu0 %v855
    %874 = vmatprep.subr.bf16.mxu0 %v823
    %875 = vmatpush1.bf16.msra.mxu0 %v822
    %876 = vmatprep.subr.bf16.mxu0 0
    %877 = vmatpush2.bf16.msra.mxu0 0
    %878 = vmatprep.subr.bf16.mxu0 0
    %879 = vmatpush2.bf16.msra.mxu0 0
    %880 = vmatprep.subr.bf16.mxu0 0
    %881 = vmatpush2.bf16.msra.mxu0 0
    %882 = vmatprep.subr.bf16.mxu0 0
    %883 = vmatpush2.bf16.msra.mxu0 0
    %884 = vmatprep.subr.bf16.mxu0 0
    %885 = vmatpush2.bf16.msra.mxu0 0
    %886 = vmatprep.subr.bf16.mxu0 0
    %887 = vmatpush2.bf16.msra.mxu0 0
    %888 = vmatprep.subr.bf16.mxu0 0
    %889 = vmatpush2.bf16.msra.mxu0 0
    %890 = vmatprep.subr.bf16.mxu0 0
    %891 = vmatpush2.bf16.msra.mxu0 0
    %892 = vmatprep.mubr.bf16.mxu0 0
    %893 = vmatmul.mubr.bf16.gmra.mxu0 %v830
    %v894 = vpop.f32.mrf.mxu0
    %v895 = vadd.f32 0.0, %v894
    %v896 = vpop.f32.mrf.mxu0
    %v897 = vadd.f32 0.0, %v896
    %v898 = vpop.f32.mrf.mxu0
    %v899 = vadd.f32 0.0, %v898
    %v900 = vpop.f32.mrf.mxu0
    %v901 = vadd.f32 0.0, %v900
    %902 = vmatprep.mubr.bf16.mxu0 0
    %903 = vmatmul.mubr.bf16.gmra.mxu0 %v833
    %v904 = vpop.f32.mrf.mxu0
    %v905 = vadd.f32 0.0, %v904
    %v906 = vpop.f32.mrf.mxu0
    %v907 = vadd.f32 0.0, %v906
    %v908 = vpop.f32.mrf.mxu0
    %v909 = vadd.f32 0.0, %v908
    %v910 = vpop.f32.mrf.mxu0
    %v911 = vadd.f32 0.0, %v910
    %912 = vmatprep.mubr.bf16.mxu0 0
    %913 = vmatmul.mubr.bf16.gmra.mxu0 %v836
    %v914 = vpop.f32.mrf.mxu0
    %v915 = vadd.f32 0.0, %v914
    %v916 = vpop.f32.mrf.mxu0
    %v917 = vadd.f32 0.0, %v916
    %v918 = vpop.f32.mrf.mxu0
    %v919 = vadd.f32 0.0, %v918
    %v920 = vpop.f32.mrf.mxu0
    %v921 = vadd.f32 0.0, %v920
    %922 = vmatprep.mubr.bf16.mxu0 0
    %923 = vmatmul.mubr.bf16.gmra.mxu0 %v839
    %v924 = vpop.f32.mrf.mxu0
    %v925 = vadd.f32 0.0, %v924
    %v926 = vpop.f32.mrf.mxu0
    %v927 = vadd.f32 0.0, %v926
    %v928 = vpop.f32.mrf.mxu0
    %v929 = vadd.f32 0.0, %v928
    %v930 = vpop.f32.mrf.mxu0
    %v931 = vadd.f32 0.0, %v930
    %932 = vmatprep.mubr.bf16.mxu0 0
    %933 = vmatmul.mubr.bf16.gmra.mxu0 %v842
    %v934 = vpop.f32.mrf.mxu0
    %v935 = vadd.f32 0.0, %v934
    %v936 = vpop.f32.mrf.mxu0
    %v937 = vadd.f32 0.0, %v936
    %v938 = vpop.f32.mrf.mxu0
    %v939 = vadd.f32 0.0, %v938
    %v940 = vpop.f32.mrf.mxu0
    %v941 = vadd.f32 0.0, %v940
    %942 = vmatprep.mubr.bf16.mxu0 0
    %943 = vmatmul.mubr.bf16.gmra.mxu0 %v845
    %v944 = vpop.f32.mrf.mxu0
    %v945 = vadd.f32 0.0, %v944
    %v946 = vpop.f32.mrf.mxu0
    %v947 = vadd.f32 0.0, %v946
    %v948 = vpop.f32.mrf.mxu0
    %v949 = vadd.f32 0.0, %v948
    %v950 = vpop.f32.mrf.mxu0
    %v951 = vadd.f32 0.0, %v950
    %952 = vmatprep.mubr.bf16.mxu0 0
    %953 = vmatmul.mubr.bf16.gmra.mxu0 %v848
    %v954 = vpop.f32.mrf.mxu0
    %v955 = vadd.f32 0.0, %v954
    %v956 = vpop.f32.mrf.mxu0
    %v957 = vadd.f32 0.0, %v956
    %v958 = vpop.f32.mrf.mxu0
    %v959 = vadd.f32 0.0, %v958
    %v960 = vpop.f32.mrf.mxu0
    %v961 = vadd.f32 0.0, %v960
    %962 = vmatprep.mubr.bf16.mxu0 0
    %963 = vmatmul.mubr.bf16.gmra.mxu0 %v851
    %v964 = vpop.f32.mrf.mxu0
    %v965 = vadd.f32 0.0, %v964
    %v966 = vpop.f32.mrf.mxu0
    %v967 = vadd.f32 0.0, %v966
    %v968 = vpop.f32.mrf.mxu0
    %v969 = vadd.f32 0.0, %v968
    %v970 = vpop.f32.mrf.mxu0
    %v971 = vadd.f32 0.0, %v970
    %972 = vdwg.mxu0
    %v973 = vsub.f32 %v895, %v897
    %v974 = vsub.f32 %v899, %v901
    %v975 = vsub.f32 %v905, %v907
    %v976 = vsub.f32 %v909, %v911
    %v977 = vsub.f32 %v915, %v917
    %v978 = vsub.f32 %v919, %v921
    %v979 = vsub.f32 %v925, %v927
    %v980 = vsub.f32 %v929, %v931
    %v981 = vsub.f32 %v935, %v937
    %v982 = vsub.f32 %v939, %v941
    %v983 = vsub.f32 %v945, %v947
    %v984 = vsub.f32 %v949, %v951
    %v985 = vsub.f32 %v955, %v957
    %v986 = vsub.f32 %v959, %v961
    %v987 = vsub.f32 %v965, %v967
    %v988 = vsub.f32 %v969, %v971
    %v989 = vsub.f32 %v897, %v895
    %v990 = vsub.f32 %v901, %v899
    %v991 = vsub.f32 %v907, %v905
    %v992 = vsub.f32 %v911, %v909
    %v993 = vsub.f32 %v917, %v915
    %v994 = vsub.f32 %v921, %v919
    %v995 = vsub.f32 %v927, %v925
    %v996 = vsub.f32 %v931, %v929
    %v997 = vsub.f32 %v937, %v935
    %v998 = vsub.f32 %v941, %v939
    %v999 = vsub.f32 %v947, %v945
    %v1000 = vsub.f32 %v951, %v949
    %v1001 = vsub.f32 %v957, %v955
    %v1002 = vsub.f32 %v961, %v959
    %v1003 = vsub.f32 %v967, %v965
    %v1004 = vsub.f32 %v971, %v969
    %v1005 = vadd.f32 %v897, %v895
    %v1006 = vadd.f32 %v901, %v899
    %v1007 = vadd.f32 %v907, %v905
    %v1008 = vadd.f32 %v911, %v909
    %v1009 = vadd.f32 %v917, %v915
    %v1010 = vadd.f32 %v921, %v919
    %v1011 = vadd.f32 %v927, %v925
    %v1012 = vadd.f32 %v931, %v929
    %v1013 = vadd.f32 %v937, %v935
    %v1014 = vadd.f32 %v941, %v939
    %v1015 = vadd.f32 %v947, %v945
    %v1016 = vadd.f32 %v951, %v949
    %v1017 = vadd.f32 %v957, %v955
    %v1018 = vadd.f32 %v961, %v959
    %v1019 = vadd.f32 %v967, %v965
    %v1020 = vadd.f32 %v971, %v969
    %v1021 = vmul.f32 %v989, %v1005
    %v1022 = vmul.f32 %v990, %v1006
    %v1023 = vmul.f32 %v991, %v1007
    %v1024 = vmul.f32 %v992, %v1008
    %v1025 = vmul.f32 %v993, %v1009
    %v1026 = vmul.f32 %v994, %v1010
    %v1027 = vmul.f32 %v995, %v1011
    %v1028 = vmul.f32 %v996, %v1012
    %v1029 = vmul.f32 %v997, %v1013
    %v1030 = vmul.f32 %v998, %v1014
    %v1031 = vmul.f32 %v999, %v1015
    %v1032 = vmul.f32 %v1000, %v1016
    %v1033 = vmul.f32 %v1001, %v1017
    %v1034 = vmul.f32 %v1002, %v1018
    %v1035 = vmul.f32 %v1003, %v1019
    %v1036 = vmul.f32 %v1004, %v1020
    %v1037 = vadd.f32 %v1021, %v1022
    %v1038 = vadd.f32 %v1037, %v1023
    %v1039 = vadd.f32 %v1038, %v1024
    %v1040 = vadd.f32 %v1039, %v1025
    %v1041 = vadd.f32 %v1040, %v1026
    %v1042 = vadd.f32 %v1041, %v1027
    %v1043 = vadd.f32 %v1042, %v1028
    %v1044 = vadd.f32 %v1043, %v1029
    %v1045 = vadd.f32 %v1044, %v1030
    %v1046 = vadd.f32 %v1045, %v1031
    %v1047 = vadd.f32 %v1046, %v1032
    %v1048 = vadd.f32 %v1047, %v1033
    %v1049 = vadd.f32 %v1048, %v1034
    %v1050 = vadd.f32 %v1049, %v1035
    %v1051 = vadd.f32 %v1050, %v1036
    %v1052 = vrot.slane %v1051, 4
    %v1053 = vadd.f32 %v1051, %v1052
    %v1054 = vrot.slane %v1053, 2
    %v1055 = vadd.f32 %v1053, %v1054
    %v1056 = vrot.slane %v1055, 1
    %v1057 = vadd.f32 %v1055, %v1056
    %1058 = vmatprep.subr.mxu0 0.0
    %1059 = vmatpush1.msra.mxu0 %v988
    %1060 = vmatprep.subr.mxu0 0.0
    %1061 = vmatpush1.msra.mxu0 %v987
    %1062 = vmatprep.subr.mxu0 0.0
    %1063 = vmatpush1.msra.mxu0 %v986
    %1064 = vmatprep.subr.mxu0 0.0
    %1065 = vmatpush1.msra.mxu0 %v985
    %1066 = vmatprep.subr.mxu0 0.0
    %1067 = vmatpush1.msra.mxu0 %v984
    %1068 = vmatprep.subr.mxu0 0.0
    %1069 = vmatpush1.msra.mxu0 %v983
    %1070 = vmatprep.subr.mxu0 0.0
    %1071 = vmatpush1.msra.mxu0 %v982
    %1072 = vmatprep.subr.mxu0 0.0
    %1073 = vmatpush1.msra.mxu0 %v981
    %1074 = vmatprep.subr.mxu0 0.0
    %1075 = vmatpush1.msra.mxu0 %v980
    %1076 = vmatprep.subr.mxu0 0.0
    %1077 = vmatpush1.msra.mxu0 %v979
    %1078 = vmatprep.subr.mxu0 0.0
    %1079 = vmatpush1.msra.mxu0 %v978
    %1080 = vmatprep.subr.mxu0 0.0
    %1081 = vmatpush1.msra.mxu0 %v977
    %1082 = vmatprep.subr.mxu0 0.0
    %1083 = vmatpush1.msra.mxu0 %v976
    %1084 = vmatprep.subr.mxu0 0.0
    %1085 = vmatpush1.msra.mxu0 %v975
    %1086 = vmatprep.subr.mxu0 0.0
    %1087 = vmatpush1.msra.mxu0 %v974
    %1088 = vmatprep.subr.mxu0 0.0
    %1089 = vmatpush1.msra.mxu0 %v973
    %1090 = vmatprep.subr.mxu0 0.0
    %1091 = vmatpush2.msra.mxu0 0.0
    %1092 = vmatprep.subr.mxu0 0.0
    %1093 = vmatpush2.msra.mxu0 0.0
    %1094 = vmatprep.subr.mxu0 0.0
    %1095 = vmatpush2.msra.mxu0 0.0
    %1096 = vmatprep.subr.mxu0 0.0
    %1097 = vmatpush2.msra.mxu0 0.0
    %1098 = vmatprep.subr.mxu0 0.0
    %1099 = vmatpush2.msra.mxu0 0.0
    %1100 = vmatprep.subr.mxu0 0.0
    %1101 = vmatpush2.msra.mxu0 0.0
    %1102 = vmatprep.subr.mxu0 0.0
    %1103 = vmatpush2.msra.mxu0 0.0
    %1104 = vmatprep.subr.mxu0 0.0
    %1105 = vmatpush2.msra.mxu0 0.0
    %1106 = vmatprep.subr.mxu0 0.0
    %1107 = vmatpush2.msra.mxu0 0.0
    %1108 = vmatprep.subr.mxu0 0.0
    %1109 = vmatpush2.msra.mxu0 0.0
    %1110 = vmatprep.subr.mxu0 0.0
    %1111 = vmatpush2.msra.mxu0 0.0
    %1112 = vmatprep.subr.mxu0 0.0
    %1113 = vmatpush2.msra.mxu0 0.0
    %1114 = vmatprep.subr.mxu0 0.0
    %1115 = vmatpush2.msra.mxu0 0.0
    %1116 = vmatprep.subr.mxu0 0.0
    %1117 = vmatpush2.msra.mxu0 0.0
    %1118 = vmatprep.subr.mxu0 0.0
    %1119 = vmatpush2.msra.mxu0 0.0
    %1120 = vmatprep.subr.mxu0 0.0
    %1121 = vmatpush2.msra.mxu0 0.0
    %1122 = vmatprep.mubr.f32.mxu0 0.0
    %1123 = vmatmul.mubr.f32.gmra.mxu0 %v583
    %v1124 = vpop.f32.mrf.mxu0
    %v1125 = vadd.f32 0.0, %v1124
    %v1126 = vpop.f32.mrf.mxu0
    %1127 = vdwg.mxu0
    %v1128 = vmul.f32 %v1125, 2.0
    %v1129 = vadd.f32 %v1057, %v1128
    %v1130 = vxor.u32 %v1129, 2147483648
    %v1131 = vmul.f32 %v1130, 1.442695
    %v1132 = vpow.pop %v1131
    %v1133 = vadd.f32 %v1132, 1.0
    %v1134 = vrcp.pop %v1133
    %v1135 = vmul.f32 1.0, %v1134
    %1136 = vst [vmem:[#allocation2] sm:$0x3] %v1135
    // Predicated region
    $region22: #{semantic_attribute_fsl_forward.1} parent=1 // pred_check
      _
    $region23: #{semantic_attribute_fsl_forward.1} parent=1 // pred_check_branch
      %1138 = sbr.rel (0) target = $region25
    $region24: #{semantic_attribute_fsl_forward.1} parent=1 // pred_region
      %s1140 = ssub.s32 32, 32
      %1141 = vsyncadd [#allocation3], %s1140
      %s1143 = sshll.u32 [#allocation2], 4
      %s1144 = int_to_ptr.vmem [resolvable:$true] %s1143
      %1146 = dma.vmem_to_hbm [thread:$0]  %s1144, 32, %s5, [#allocation3]
    $region25: #{semantic_attribute_fsl_forward.1} parent=1 // pred_fallthru
      _
    // Predicated region
    $region26: #{semantic_attribute_fsl_forward.1} parent=1 // pred_check
      _
    $region27: #{semantic_attribute_fsl_forward.1} parent=1 // pred_check_branch
      %1148 = sbr.rel (0) target = $region29
    $region28: #{semantic_attribute_fsl_forward.1} parent=1 // pred_region
      %1149 = dma.done [#allocation3], 32
    $region29: #{semantic_attribute_fsl_forward.1} parent=1 // pred_fallthru
      _
    %1150 = vsyncpa [#allocation3], 1

</llo_original>
